<compile_context>
chip_gen: v7x
topology: tpu7x:2x2x1
jax: 0.10.0
libtpu: 0.0.40
codegen_flags: <defaults>
</compile_context>

<pallas_src>
import functools

import jax
import jax.numpy as jnp
from jax.experimental import pallas as pl
from jax.experimental.pallas import tpu as pltpu

LANES = 128
_STATIC_CHUNK_LIMIT = 64   # fully unroll the in-VMEM chunk loop up to this count
_FORI_UNROLL = 4           # unroll factor for the rolled (fori_loop) chunk loop
_MAX_TB = 256


def _round_up(v, m):
    return -(-v // m) * m


def _vmem_capacity_bytes():
    try:
        info = pltpu.get_tpu_info()
        cap = getattr(info, "vmem_capacity_bytes", None)
        if cap:
            return int(cap)
    except Exception:
        pass
    return 128 << 20   # v5e / v6e physical VMEM


def _sublane_pack(*dtypes):
    """Min sublane multiple so packed (<32-bit) dtypes fill whole packed rows."""
    p = 8
    for dt in dtypes:
        p = max(p, 32 // max(1, jnp.dtype(dt).itemsize))
    return p


def _plan(rows, n, vmem_cap, pack, max_tile_bytes=None):
    """Pick (tb, tn, acc_w, num_chunks, rem, needs_mask)."""
    # Per-input-stream tile budget (in f32-equivalent elements): ~2 MiB on v7x
    # (64 MiB VMEM/TC), ~4 MiB on v5e/v6e.  Measured roofline returns flatten past
    # ~1-2 MiB, and 3 streams x 2 buffers stays far below the scoped-VMEM limit.
    if max_tile_bytes is None:
        max_tile_bytes = (2 << 20) if vmem_cap <= (64 << 20) else (4 << 20)
    budget_elems = max(LANES * 8, max_tile_bytes // 4)
    n_rounded = _round_up(n, LANES)

    # Batch tile: a multiple of the packed sublane tile when possible, grown only
    # while N alone cannot fill the budget, and always keeping >= 2 batch tiles so
    # the "parallel" grid axis can span both v7x TensorCores.
    if rows % pack == 0:
        tb = pack
    elif rows % 8 == 0:
        tb = 8
    else:
        tb = rows                     # full-dim block (legal); typically tiny B
    if tb < rows:
        while (tb * 2 <= _MAX_TB and rows % (tb * 2) == 0
               and rows // (tb * 2) >= 2 and tb * n_rounded < budget_elems):
            tb *= 2

    tn_cap = max(LANES, (budget_elems // tb) // LANES * LANES)

    if n_rounded <= tn_cap:
        # Case A: a single column block covers the whole (possibly ragged) row.
        # Exact full-dim block => no out-of-bounds lanes, no mask needed.
        tn = n
        acc_w = 512 if n >= 512 else (256 if n >= 256 else 128)
        num_chunks = n // acc_w
        rem = n - num_chunks * acc_w
        needs_mask = False
    else:
        # Case B: many 128-aligned column blocks; the ragged last block's OOB
        # lanes hold garbage (including the mask) and are zeroed in-kernel.
        tn = tn_cap
        acc_w = 512 if tn % 512 == 0 else (256 if tn % 256 == 0 else 128)
        num_chunks = tn // acc_w
        rem = 0
        needs_mask = (n % tn) != 0
    return tb, tn, acc_w, num_chunks, rem, needs_mask


def _weighted_huber_kernel(x_ref, t_ref, m_ref, w_ref, o_ref, acc_ref, *,
                           inv_batch, n_total, block_n, acc_w, num_chunks, rem,
                           needs_mask):
    k = pl.program_id(1)

    @pl.when(k == 0)
    def _init():
        acc_ref[...] = jnp.zeros_like(acc_ref)

    tb = acc_ref.shape[0]
    if needs_mask:
        col0 = k * block_n                                    # global column base
        lane_iota = jax.lax.broadcasted_iota(jnp.int32, (tb, acc_w), 1)  # hoisted

    def huber(off, width):
        # Slice straight from the VMEM refs and cast per chunk: native-dtype DMA,
        # f32 math, only a few live vregs regardless of the DMA block size.
        x = x_ref[:, pl.ds(off, width)].astype(jnp.float32)
        t = t_ref[:, pl.ds(off, width)].astype(jnp.float32)
        m = m_ref[:, pl.ds(off, width)].astype(jnp.float32)
        d = x - t
        ad = jnp.abs(d)
        # (|d| < 1) * d^2 + (|d| >= 1) * (|d| - 0.5), exactly as the torch module.
        return jnp.where(ad < 1.0, d * d, ad - 0.5) * m

    def accum(off, partial):
        loss = huber(off, acc_w)
        if needs_mask:
            # Zero the garbage lanes of the ragged last column block.
            loss = jnp.where(lane_iota < (n_total - col0 - off), loss, 0.0)
        return partial + loss           # (tb, acc_w): acc_w/128 independent chains

    if num_chunks > 0:
        if num_chunks <= _STATIC_CHUNK_LIMIT:
            partial = acc_ref[...]                 # read the accumulator once ...
            for j in range(num_chunks):            # ... fully unrolled, static offs
                partial = accum(j * acc_w, partial)
            acc_ref[...] = partial                 # ... and write it once.
        else:
            def body(j, partial):
                return accum(pl.multiple_of(j * acc_w, acc_w), partial)
            acc_ref[...] = jax.lax.fori_loop(0, num_chunks, body, acc_ref[...],
                                             unroll=_FORI_UNROLL)

    # Ragged remainder of a full-width (single column block) row: < acc_w columns,
    # folded straight into a (tb, 1) row-sum (only occurs when nk == 1).
    rem_row = None
    if rem > 0:
        rem_row = jnp.sum(huber(num_chunks * acc_w, rem), axis=1, keepdims=True)

    @pl.when(k == pl.num_programs(1) - 1)
    def _finalize():
        row = jnp.sum(acc_ref[...], axis=1, keepdims=True)     # one XLU reduce
        if rem_row is not None:
            row = row + rem_row
        o_ref[...] = row * w_ref[...] * inv_batch


def weighted_huber_loss(inp, target, weights, mask, *, _max_tile_bytes=None):
    """Weighted Huber loss (PER).  inp/target/mask: (B, ...); weights: (B,).

    Inputs stream in their native dtype (supplying the mask as bool/int8 cuts its
    HBM traffic 4x vs float32).  Returns a float32 scalar.
    `_max_tile_bytes` is a test-only override of the per-input tile budget.
    """
    batch = inp.shape[0]
    x = inp.reshape(batch, -1)
    t = target.reshape(batch, -1)
    m = mask.reshape(batch, -1)
    w = weights.reshape(batch).astype(jnp.float32)
    n = x.shape[1]

    # Copy-free sublane densification for tiny / non-multiple-of-8 batches:
    # (B, N) -> (8B, N/8) is a free row-major reshape; the per-row weighted sum is
    # linear, so repeating each weight 8x and summing every sub-row is exact.
    rows = batch
    if n % 8 == 0 and n >= 8 and (batch % 8 != 0 or batch < 16):
        rows, n = batch * 8, n // 8
        x = x.reshape(rows, n)
        t = t.reshape(rows, n)
        m = m.reshape(rows, n)
        w = jnp.repeat(w, 8)
    w = w.reshape(rows, 1)

    vmem_cap = _vmem_capacity_bytes()
    pack = _sublane_pack(x.dtype, t.dtype, m.dtype)
    tb, tn, acc_w, num_chunks, rem, needs_mask = _plan(
        rows, n, vmem_cap, pack, _max_tile_bytes)

    nb = pl.cdiv(rows, tb)          # tb divides rows, or tb == rows
    nk = pl.cdiv(n, tn)
    # TODO(synk): when nb == 1 (tiny, non-densifiable batch) add an N-split
    # "parallel" grid axis (per-core partial columns summed in the wrapper) so the
    # second v7x TensorCore is not idle.

    # Raise the scoped-VMEM limit so the double-buffered big tiles fit, leaving
    # headroom below the generation's physical VMEM (64 MiB/TC on v7x).
    stream_bytes = x.dtype.itemsize + t.dtype.itemsize + m.dtype.itemsize
    need = 2 * tb * tn * stream_bytes + tb * acc_w * 4 + (4 << 20)
    vmem_limit = int(min(max(need, 32 << 20), max(vmem_cap - (16 << 20), 32 << 20)))

    kernel = functools.partial(
        _weighted_huber_kernel,
        inv_batch=1.0 / batch,            # divide by the ORIGINAL batch size
        n_total=n, block_n=tn, acc_w=acc_w,
        num_chunks=num_chunks, rem=rem, needs_mask=needs_mask)

    per_row = pl.pallas_call(
        kernel,
        out_shape=jax.ShapeDtypeStruct((rows, 1), jnp.float32),
        grid_spec=pltpu.PrefetchScalarGridSpec(
            num_scalar_prefetch=0,
            grid=(nb, nk),                        # reduction (column) axis last
            in_specs=[
                pl.BlockSpec((tb, tn), lambda i, k: (i, k)),
                pl.BlockSpec((tb, tn), lambda i, k: (i, k)),
                pl.BlockSpec((tb, tn), lambda i, k: (i, k)),
                # weights: tiny (tb, 1) block, constant over k.
                pl.BlockSpec((tb, 1), lambda i, k: (i, 0)),
            ],
            out_specs=pl.BlockSpec((tb, 1), lambda i, k: (i, 0)),
            scratch_shapes=[pltpu.VMEM((tb, acc_w), jnp.float32)],
        ),
        compiler_params=pltpu.CompilerParams(
            dimension_semantics=("parallel", "arbitrary"),
            vmem_limit_bytes=vmem_limit),
    )(x, t, m, w)

    # Final O(rows) reduction over per-row weighted losses (already / batch).
    return jnp.sum(per_row)


def _reference(inp, target, weights, mask):
    b = inp.shape[0]
    d = inp.astype(jnp.float32) - target.astype(jnp.float32)
    loss = jnp.where(jnp.abs(d) < 1.0, d * d, jnp.abs(d) - 0.5)
    loss = loss * mask.astype(jnp.float32)
    row = loss.reshape(b, -1).sum(axis=1)
    return (weights.astype(jnp.float32) * row).sum() / b


if __name__ == "__main__":
    key = jax.random.PRNGKey(0)

    def make_inputs(k, shape):
        k1, k2, k3, k4 = jax.random.split(k, 4)
        inp = jax.random.normal(k1, shape, dtype=jnp.float32) * 2.0
        target = jax.random.normal(k2, shape, dtype=jnp.float32) * 2.0
        weights = jax.random.uniform(k3, (shape[0],), dtype=jnp.float32)
        mask = (jax.random.uniform(k4, shape) > 0.3).astype(jnp.float32)
        return inp, target, weights, mask

    # 1) spec shape (B,C,H,W)=(2,4,16,16): densified single-block fast path
    # 2) ragged row width (N=300): exact full-dim block + sub-128 remainder fold
    # 3) forced multi-column-block path (tiny tile override): multi-k accumulation
    #    across a garbage tail that must be iota-masked, nb=2 parallel batch tiles
    cases = [
        ((2, 4, 16, 16), None),
        ((2, 3, 10, 10), None),
        ((16, 3, 10, 11), 2048),
    ]
    for idx, (shape, cap) in enumerate(cases):
        key, sub = jax.random.split(key)
        inp, target, weights, mask = make_inputs(sub, shape)
        out = jax.block_until_ready(
            weighted_huber_loss(inp, target, weights, mask, _max_tile_bytes=cap))
        ref = _reference(inp, target, weights, mask)
        assert jnp.allclose(out, ref, rtol=1e-5, atol=1e-5), (idx, out, ref)

    print("KERNEL_OK")
</pallas_src>

<mosaic_0001>
module attributes {stable_mosaic.version = 11 : i64} {
  func.func @_weighted_huber_kernel(%arg0: i32, %arg1: i32, %arg2: memref<8x128xf32, #tpu.memory_space<vmem>>, %arg3: memref<8x128xf32, #tpu.memory_space<vmem>>, %arg4: memref<8x128xf32, #tpu.memory_space<vmem>>, %arg5: memref<8x1xf32, #tpu.memory_space<vmem>>, %arg6: memref<8x1xf32, #tpu.memory_space<vmem>>, %arg7: memref<8x128xf32, #tpu.memory_space<vmem>>) attributes {dimension_semantics = [#tpu.dimension_semantics<parallel>, #tpu.dimension_semantics<arbitrary>], iteration_bounds = array<i64: 2, 1>, scalar_prefetch = 0 : i64, scratch_operands = 1 : i64, tpu.core_type = #tpu.core_type<tc>, window_params = [{transform_indices = @transform_0, window_bounds = array<i64: 8, 128>}, {transform_indices = @transform_1, window_bounds = array<i64: 8, 128>}, {transform_indices = @transform_2, window_bounds = array<i64: 8, 128>}, {transform_indices = @transform_3, window_bounds = array<i64: 8, 1>}, {transform_indices = @transform_4, window_bounds = array<i64: 8, 1>}]} {
    %c0_i32 = arith.constant 0 : i32
    %0 = arith.cmpi eq, %arg1, %c0_i32 : i32
    %1 = arith.extui %0 : i1 to i32
    %c0_i32_0 = arith.constant 0 : i32
    %2 = arith.cmpi ne, %1, %c0_i32_0 : i32
    scf.if %2 {
      %cst_13 = arith.constant 0.000000e+00 : f32
      %21 = vector.broadcast %cst_13 : f32 to vector<8x128xf32>
      %c0_14 = arith.constant 0 : index
      %c0_15 = arith.constant 0 : index
      %22 = vector.load %arg7[%c0_14, %c0_15] : memref<8x128xf32, #tpu.memory_space<vmem>>, vector<8x128xf32>
      tpu.vector_store %arg7[%c0_14, %c0_15], %21 {strides = array<i32>} : memref<8x128xf32, #tpu.memory_space<vmem>>, vector<8x128xf32>,
    } else {
    }
    %c0 = arith.constant 0 : index
    %c0_1 = arith.constant 0 : index
    %3 = vector.load %arg7[%c0, %c0_1] : memref<8x128xf32, #tpu.memory_space<vmem>>, vector<8x128xf32>
    %c0_2 = arith.constant 0 : index
    %c0_3 = arith.constant 0 : index
    %4 = vector.load %arg2[%c0_2, %c0_3] : memref<8x128xf32, #tpu.memory_space<vmem>>, vector<8x128xf32>
    %c0_4 = arith.constant 0 : index
    %c0_5 = arith.constant 0 : index
    %5 = vector.load %arg3[%c0_4, %c0_5] : memref<8x128xf32, #tpu.memory_space<vmem>>, vector<8x128xf32>
    %c0_6 = arith.constant 0 : index
    %c0_7 = arith.constant 0 : index
    %6 = vector.load %arg4[%c0_6, %c0_7] : memref<8x128xf32, #tpu.memory_space<vmem>>, vector<8x128xf32>
    %7 = arith.subf %4, %5 : vector<8x128xf32>
    %8 = math.absf %7 : vector<8x128xf32>
    %cst = arith.constant 1.000000e+00 : f32
    %9 = vector.broadcast %cst : f32 to vector<8x128xf32>
    %10 = arith.cmpf olt, %8, %9 : vector<8x128xf32>
    %11 = arith.mulf %7, %7 : vector<8x128xf32>
    %cst_8 = arith.constant 5.000000e-01 : f32
    %12 = vector.broadcast %cst_8 : f32 to vector<8x128xf32>
    %13 = arith.subf %8, %12 : vector<8x128xf32>
    %14 = arith.select %10, %11, %13 : vector<8x128xi1>, vector<8x128xf32>
    %15 = arith.mulf %14, %6 : vector<8x128xf32>
    %16 = arith.addf %3, %15 : vector<8x128xf32>
    %c0_9 = arith.constant 0 : index
    %c0_10 = arith.constant 0 : index
    %17 = vector.load %arg7[%c0_9, %c0_10] : memref<8x128xf32, #tpu.memory_space<vmem>>, vector<8x128xf32>
    tpu.vector_store %arg7[%c0_9, %c0_10], %16 {strides = array<i32>} : memref<8x128xf32, #tpu.memory_space<vmem>>, vector<8x128xf32>,
    %c0_i32_11 = arith.constant 0 : i32
    %18 = arith.cmpi eq, %arg1, %c0_i32_11 : i32
    %19 = arith.extui %18 : i1 to i32
    %c0_i32_12 = arith.constant 0 : i32
    %20 = arith.cmpi ne, %19, %c0_i32_12 : i32
    scf.if %20 {
      %c0_13 = arith.constant 0 : index
      %c0_14 = arith.constant 0 : index
      %21 = vector.load %arg7[%c0_13, %c0_14] : memref<8x128xf32, #tpu.memory_space<vmem>>, vector<8x128xf32>
      %cst_15 = arith.constant dense<0.000000e+00> : vector<8xf32>
      %22 = vector.multi_reduction <add>, %21, %cst_15 [1] : vector<8x128xf32> to vector<8xf32>
      %23 = vector.shape_cast %22 : vector<8xf32> to vector<8x1xf32>
      %c0_16 = arith.constant 0 : index
      %c0_17 = arith.constant 0 : index
      %24 = vector.load %arg5[%c0_16, %c0_17] : memref<8x1xf32, #tpu.memory_space<vmem>>, vector<8x1xf32>
      %25 = arith.mulf %23, %24 : vector<8x1xf32>
      %cst_18 = arith.constant 5.000000e-01 : f32
      %26 = vector.broadcast %cst_18 : f32 to vector<8x1xf32>
      %27 = arith.mulf %25, %26 : vector<8x1xf32>
      %c0_19 = arith.constant 0 : index
      %c0_20 = arith.constant 0 : index
      %28 = vector.load %arg6[%c0_19, %c0_20] : memref<8x1xf32, #tpu.memory_space<vmem>>, vector<8x1xf32>
      tpu.vector_store %arg6[%c0_19, %c0_20], %27 {strides = array<i32>} : memref<8x1xf32, #tpu.memory_space<vmem>>, vector<8x1xf32>,
    } else {
    }
    return
  }
  func.func @transform_0(%arg0: i32, %arg1: i32) -> (i32, i32) {
    %c0_i32 = arith.constant 0 : i32
    return %arg0, %arg1 : i32, i32
  }
  func.func @transform_1(%arg0: i32, %arg1: i32) -> (i32, i32) {
    %c0_i32 = arith.constant 0 : i32
    return %arg0, %arg1 : i32, i32
  }
  func.func @transform_2(%arg0: i32, %arg1: i32) -> (i32, i32) {
    %c0_i32 = arith.constant 0 : i32
    return %arg0, %arg1 : i32, i32
  }
  func.func @transform_3(%arg0: i32, %arg1: i32) -> (i32, i32) {
    %c0_i32 = arith.constant 0 : i32
    %c0_i32_0 = arith.constant 0 : i32
    return %arg0, %c0_i32 : i32, i32
  }
  func.func @transform_4(%arg0: i32, %arg1: i32) -> (i32, i32) {
    %c0_i32 = arith.constant 0 : i32
    %c0_i32_0 = arith.constant 0 : i32
    return %arg0, %c0_i32 : i32, i32
  }
}

</mosaic_0001>

<llo_original>
// kernel: tpu_custom_call.1
$region0: #{tpu_custom_call.1}
  #allocation0 [shape = 'u32[]', space=smem, size = 0x4, offset = 0x4, fixed_abs, tag = 'smem constant byte address 0x4 - core index']
  #allocation1 [shape = 'u32[144,128]{1,0:T(1,128)}', space=vmem, size = 0x12000, scoped, tag = 'internal scratch']
  #allocation2 [shape = 'f32[8,128]{1,0:T(8,128)}', space=vmem, size = 0x1000, scoped, tag = 'scratch operand']
  %s0 = inlined_call_operand.vmem [shape: f32[16,128], index: 0, kind: input, shape index: {}]
  %s1 = inlined_call_operand.hbm [shape: f32[16,128], index: 1, kind: input, shape index: {}]
  %s2 = inlined_call_operand.hbm [shape: f32[16,128], index: 2, kind: input, shape index: {}]
  %s3 = inlined_call_operand.vmem [shape: f32[16,1], index: 3, kind: input, shape index: {}]
  %s4 = inlined_call_operand.vmem [shape: f32[16,1], index: 4, kind: output, shape index: {}]
  %s5 = sld [smem:[#allocation0]]
  $region65: #{tpu_custom_call.1} parent=0
    _
  %s7 = ssub.s32 1, %s5
  %s8 = scalar_select 0, %s7, %s5
  $region1: #{tpu_custom_call.1} parent=0
    #allocation3 [shape = 'u8[8192]{0}', space=vmem, size = 0x2000, scoped, tag = 'input window, operand 1']
    #allocation4 [shape = 's32[2]{0}', space=sflag, size = 0x8, scoped, tag = 'scoped memory for tpu_custom_call.1']
    #allocation5 [shape = 'u8[8192]{0}', space=vmem, size = 0x2000, scoped, tag = 'input window, operand 2']
    #allocation6 [shape = 's32[2]{0}', space=sflag, size = 0x8, scoped, tag = 'scoped memory for tpu_custom_call.1']
    %9 = vsyncpa [#allocation4], 0
    %s10 = scalar_lea.sflag [#allocation4], 1
    %11 = vsyncpa %s10, 0
    %12 = vsyncpa [#allocation6], 0
    %s13 = scalar_lea.sflag [#allocation6], 1
    %14 = vsyncpa %s13, 0
    loop: start=0, step=1, limit=4
    $region2: #{tpu_custom_call.1} parent=1 // loop_pre_header
      _
    $region3: #{tpu_custom_call.1} parent=1 // loop_header
      %s16 = sphi 0, %s20
      %p17 = scmp.ge.s32.totalorder %s16, 4
      %s23 = sphi 0, %s35
      %s24 = sphi 0, %s31
      %s25 = sphi 0, %s23
      %s26 = sphi 0, %s24
      %s27 = sphi 0, %s25
      %s28 = sphi 0, %s26
      %s40 = sphi 0, %s42
      %s43 = sphi 0, %s40
      %s44 = sphi 0, %s43
      %s60 = sphi 0, %s44
      %s68 = sphi 0, %s70
      %s71 = sphi 0, %s68
      %s72 = sphi 0, %s71
      %s88 = sphi 0, %s72
      %s96 = sphi 0, %s98
      %s99 = sphi 0, %s96
      %s100 = sphi 0, %s99
      %s116 = sphi 0, %s100
      %s122 = sphi 0, %s124
      %s125 = sphi 0, %s122
      %s126 = sphi 0, %s125
      %s142 = sphi 0, %s126
      %s148 = sphi 0, %s150
      %s151 = sphi 0, %s148
      %s152 = sphi 0, %s151
      %s168 = sphi 0, %s152
    $region4: #{tpu_custom_call.1} parent=1 // loop_header_branch
      %19 = sbr.rel (%p17) target = $region8
    $region5: #{tpu_custom_call.1} parent=1 // loop_body
      %s21 = ssub.s32 %s16, 1
      %s22 = ssub.s32 %s16, 2
      %s29 = sadd.s32 1, %s24
      %p30 = scmp.ge.s32.totalorder %s29, 1
      %s31 = scalar_select %p30, 0, %s29
      %s32 = sadd.s32 1, %s23
      %s33 = scalar_select %p30, %s32, %s23
      %p34 = scmp.ge.s32.totalorder %s33, 2
      %s35 = scalar_select %p34, 0, %s33
      %s36 = ssub.s32 %s23, %s35
      %s37 = ssub.s32 %s24, %s31
      %s38 = sor.u32 %s36, %s37
      %p39 = scmp.eq.s32.totalorder %s38, 0
      %s41 = sadd.s32 %s40, 1
      %s42 = scalar_select %p39, %s40, %s41
      %p45 = pneg %p39
      %p46 = scmp.eq.s32.totalorder %s16, 1
      %p47 = por %p45, %p46
      %p48 = scmp.ne.s32.totalorder %s40, %s43
      %p49 = scmp.eq.s32.totalorder %s16, 0
      %p50 = por %p48, %p49
      %p51 = scmp.ne.s32.totalorder %s40, %s43
      %p52 = scmp.eq.s32.totalorder %s21, 1
      %p53 = por %p51, %p52
      %p54 = scmp.ne.s32.totalorder %s43, %s44
      %p55 = scmp.eq.s32.totalorder %s21, 0
      %p56 = por %p54, %p55
      %p57 = scmp.ne.s32.totalorder %s43, %s44
      %p58 = scmp.eq.s32.totalorder %s22, 1
      %p59 = por %p57, %p58
      %p61 = scmp.ne.s32.totalorder %s44, %s60
      %p62 = scmp.eq.s32.totalorder %s22, 0
      %p63 = por %p61, %p62
      %s64 = ssub.s32 %s23, %s35
      %s65 = ssub.s32 %s24, %s31
      %s66 = sor.u32 %s64, %s65
      %p67 = scmp.eq.s32.totalorder %s66, 0
      %s69 = sadd.s32 %s68, 1
      %s70 = scalar_select %p67, %s68, %s69
      %p73 = pneg %p67
      %p74 = scmp.eq.s32.totalorder %s16, 1
      %p75 = por %p73, %p74
      %p76 = scmp.ne.s32.totalorder %s68, %s71
      %p77 = scmp.eq.s32.totalorder %s16, 0
      %p78 = por %p76, %p77
      %p79 = scmp.ne.s32.totalorder %s68, %s71
      %p80 = scmp.eq.s32.totalorder %s21, 1
      %p81 = por %p79, %p80
      %p82 = scmp.ne.s32.totalorder %s71, %s72
      %p83 = scmp.eq.s32.totalorder %s21, 0
      %p84 = por %p82, %p83
      %p85 = scmp.ne.s32.totalorder %s71, %s72
      %p86 = scmp.eq.s32.totalorder %s22, 1
      %p87 = por %p85, %p86
      %p89 = scmp.ne.s32.totalorder %s72, %s88
      %p90 = scmp.eq.s32.totalorder %s22, 0
      %p91 = por %p89, %p90
      %s92 = ssub.s32 %s23, %s35
      %s93 = ssub.s32 %s24, %s31
      %s94 = sor.u32 %s92, %s93
      %p95 = scmp.eq.s32.totalorder %s94, 0
      %s97 = sadd.s32 %s96, 1
      %s98 = scalar_select %p95, %s96, %s97
      %p101 = pneg %p95
      %p102 = scmp.eq.s32.totalorder %s16, 1
      %p103 = por %p101, %p102
      %p104 = scmp.ne.s32.totalorder %s96, %s99
      %p105 = scmp.eq.s32.totalorder %s16, 0
      %p106 = por %p104, %p105
      %p107 = scmp.ne.s32.totalorder %s96, %s99
      %p108 = scmp.eq.s32.totalorder %s21, 1
      %p109 = por %p107, %p108
      %p110 = scmp.ne.s32.totalorder %s99, %s100
      %p111 = scmp.eq.s32.totalorder %s21, 0
      %p112 = por %p110, %p111
      %p113 = scmp.ne.s32.totalorder %s99, %s100
      %p114 = scmp.eq.s32.totalorder %s22, 1
      %p115 = por %p113, %p114
      %p117 = scmp.ne.s32.totalorder %s100, %s116
      %p118 = scmp.eq.s32.totalorder %s22, 0
      %p119 = por %p117, %p118
      %s120 = ssub.s32 %s23, %s35
      %p121 = scmp.eq.s32.totalorder %s120, 0
      %s123 = sadd.s32 %s122, 1
      %s124 = scalar_select %p121, %s122, %s123
      %p127 = pneg %p121
      %p128 = scmp.eq.s32.totalorder %s16, 1
      %p129 = por %p127, %p128
      %p130 = scmp.ne.s32.totalorder %s122, %s125
      %p131 = scmp.eq.s32.totalorder %s16, 0
      %p132 = por %p130, %p131
      %p133 = scmp.ne.s32.totalorder %s122, %s125
      %p134 = scmp.eq.s32.totalorder %s21, 1
      %p135 = por %p133, %p134
      %p136 = scmp.ne.s32.totalorder %s125, %s126
      %p137 = scmp.eq.s32.totalorder %s21, 0
      %p138 = por %p136, %p137
      %p139 = scmp.ne.s32.totalorder %s125, %s126
      %p140 = scmp.eq.s32.totalorder %s22, 1
      %p141 = por %p139, %p140
      %p143 = scmp.ne.s32.totalorder %s126, %s142
      %p144 = scmp.eq.s32.totalorder %s22, 0
      %p145 = por %p143, %p144
      %s146 = ssub.s32 %s23, %s35
      %p147 = scmp.eq.s32.totalorder %s146, 0
      %s149 = sadd.s32 %s148, 1
      %s150 = scalar_select %p147, %s148, %s149
      %p153 = pneg %p147
      %p154 = scmp.eq.s32.totalorder %s16, 1
      %p155 = por %p153, %p154
      %p156 = scmp.ne.s32.totalorder %s148, %s151
      %p157 = scmp.eq.s32.totalorder %s16, 0
      %p158 = por %p156, %p157
      %p159 = scmp.ne.s32.totalorder %s148, %s151
      %p160 = scmp.eq.s32.totalorder %s21, 1
      %p161 = por %p159, %p160
      %p162 = scmp.ne.s32.totalorder %s151, %s152
      %p163 = scmp.eq.s32.totalorder %s21, 0
      %p164 = por %p162, %p163
      %p165 = scmp.ne.s32.totalorder %s151, %s152
      %p166 = scmp.eq.s32.totalorder %s22, 1
      %p167 = por %p165, %p166
      %p169 = scmp.ne.s32.totalorder %s152, %s168
      %p170 = scmp.eq.s32.totalorder %s22, 0
      %p171 = por %p169, %p170
      %p172 = scmp.le.s32.totalorder 1, %s16
      %p173 = scmp.lt.s32.totalorder %s16, 3
      %p174 = pnand %p172, %p173
      %p175 = pneg %p174
      // Predicated region
      $region9: #{tpu_custom_call.1} parent=5 // pred_check
        _
      $region10: #{tpu_custom_call.1} parent=5 // pred_check_branch
        %177 = sbr.rel (%p174) target = $region12
      $region11: #{tpu_custom_call.1} parent=5 // pred_region
        %s178 = ssub.s32 %s16, 1
      $region12: #{tpu_custom_call.1} parent=5 // pred_fallthru
        _
      %p179 = scmp.lt.s32.totalorder %s16, 2
      // Predicated region
      $region13: #{tpu_custom_call.1} parent=5 // pred_check
        %p180 = pneg %p179
      $region14: #{tpu_custom_call.1} parent=5 // pred_check_branch
        %182 = sbr.rel (%p180) target = $region16
      $region15: #{tpu_custom_call.1} parent=5 // pred_region
        // Predicated region
        $region17: #{tpu_custom_call.1} parent=15 // pred_check
          %p183 = pneg %p50
        $region18: #{tpu_custom_call.1} parent=15 // pred_check_branch
          %185 = sbr.rel (%p183) target = $region20
        $region19: #{tpu_custom_call.1} parent=15 // pred_region
          %p186 = scmp.lt.s32.totalorder %s23, 1
          %s187 = scalar_select %p186, %s23, 1
          %p188 = scmp.lt.s32.totalorder %s24, 0
          %s189 = scalar_select %p188, %s24, 0
          %s190 = sadd.s32 %s189, %s187
          %s191 = smul.addr %s190, 8
          %s192 = scalar_lea.vmem %s0, %s191
        $region20: #{tpu_custom_call.1} parent=15 // pred_fallthru
          _
        // Predicated region
        $region21: #{tpu_custom_call.1} parent=15 // pred_check
          %p193 = pneg %p78
        $region22: #{tpu_custom_call.1} parent=15 // pred_check_branch
          %195 = sbr.rel (%p193) target = $region24
        $region23: #{tpu_custom_call.1} parent=15 // pred_region
          %s196 = sand.u32 %s68, 1
          %s197 = scalar_lea.sflag [#allocation4], %s196
          %s198 = sand.u32 %s68, 1
          %s199 = smul.addr %s198, 8
          %s200 = scalar_lea.vmem [#allocation3], %s199
          %s202 = ssub.s32 128, 128
          %203 = vsyncadd %s197, %s202
          %s204 = sadd.s32 %s24, %s23
          %s205 = smul.addr %s204, 128
          %s206 = scalar_lea.hbm %s1, %s205
          %s208 = sshll.u32 %s200, 4
          %s209 = int_to_ptr.vmem [resolvable:$true] %s208
          %211 = dma.hbm_to_vmem [thread:$0]  %s206, 128, %s209, %s197
        $region24: #{tpu_custom_call.1} parent=15 // pred_fallthru
          _
        // Predicated region
        $region25: #{tpu_custom_call.1} parent=15 // pred_check
          %p212 = pneg %p106
        $region26: #{tpu_custom_call.1} parent=15 // pred_check_branch
          %214 = sbr.rel (%p212) target = $region28
        $region27: #{tpu_custom_call.1} parent=15 // pred_region
          %s215 = sand.u32 %s96, 1
          %s216 = scalar_lea.sflag [#allocation6], %s215
          %s217 = sand.u32 %s96, 1
          %s218 = smul.addr %s217, 8
          %s219 = scalar_lea.vmem [#allocation5], %s218
          %s221 = ssub.s32 128, 128
          %222 = vsyncadd %s216, %s221
          %s223 = sadd.s32 %s24, %s23
          %s224 = smul.addr %s223, 128
          %s225 = scalar_lea.hbm %s2, %s224
          %s227 = sshll.u32 %s219, 4
          %s228 = int_to_ptr.vmem [resolvable:$true] %s227
          %230 = dma.hbm_to_vmem [thread:$0]  %s225, 128, %s228, %s216
        $region28: #{tpu_custom_call.1} parent=15 // pred_fallthru
          _
        // Predicated region
        $region29: #{tpu_custom_call.1} parent=15 // pred_check
          %p231 = pneg %p132
        $region30: #{tpu_custom_call.1} parent=15 // pred_check_branch
          %233 = sbr.rel (%p231) target = $region32
        $region31: #{tpu_custom_call.1} parent=15 // pred_region
          %p234 = scmp.lt.s32.totalorder %s23, 1
          %s235 = scalar_select %p234, %s23, 1
          %s236 = smul.addr %s235, 8
          %s237 = scalar_lea.vmem %s3, %s236
        $region32: #{tpu_custom_call.1} parent=15 // pred_fallthru
          _
      $region16: #{tpu_custom_call.1} parent=5 // pred_fallthru
        _
      %p238 = scmp.le.s32.totalorder 1, %s16
      %p239 = scmp.lt.s32.totalorder %s16, 3
      %p240 = pnand %p238, %p239
      %p241 = pneg %p240
      // Predicated region
      $region33: #{tpu_custom_call.1} parent=5 // pred_check
        _
      $region34: #{tpu_custom_call.1} parent=5 // pred_check_branch
        %243 = sbr.rel (%p240) target = $region36
      $region35: #{tpu_custom_call.1} parent=5 // pred_region
        %s244 = ssub.s32 %s16, 1
        %s245 = sand.u32 %s71, 1
        %s246 = scalar_lea.sflag [#allocation4], %s245
        %s247 = sand.u32 %s71, 1
        %s248 = smul.addr %s247, 8
        %s249 = scalar_lea.vmem [#allocation3], %s248
        // Predicated region
        $region37: #{tpu_custom_call.1} parent=35 // pred_check
          %p250 = pneg %p84
        $region38: #{tpu_custom_call.1} parent=35 // pred_check_branch
          %252 = sbr.rel (%p250) target = $region40
        $region39: #{tpu_custom_call.1} parent=35 // pred_region
          %253 = dma.done %s246, 128
        $region40: #{tpu_custom_call.1} parent=35 // pred_fallthru
          _
        %s254 = sand.u32 %s99, 1
        %s255 = scalar_lea.sflag [#allocation6], %s254
        %s256 = sand.u32 %s99, 1
        %s257 = smul.addr %s256, 8
        %s258 = scalar_lea.vmem [#allocation5], %s257
        // Predicated region
        $region41: #{tpu_custom_call.1} parent=35 // pred_check
          %p259 = pneg %p112
        $region42: #{tpu_custom_call.1} parent=35 // pred_check_branch
          %261 = sbr.rel (%p259) target = $region44
        $region43: #{tpu_custom_call.1} parent=35 // pred_region
          %262 = dma.done %s255, 128
        $region44: #{tpu_custom_call.1} parent=35 // pred_fallthru
          _
        %p263 = scmp.lt.s32.totalorder %s25, 1
        %s264 = scalar_select %p263, %s25, 1
        %p265 = scmp.lt.s32.totalorder %s26, 0
        %s266 = scalar_select %p265, %s26, 0
        %s267 = sadd.s32 %s266, %s264
        %s268 = smul.addr %s267, 8
        %s269 = scalar_lea.vmem %s0, %s268
        %p270 = pneg %p56
        %p271 = pneg %p53
        %s272 = sand.u32 %s71, 1
        %s273 = scalar_lea.sflag [#allocation4], %s272
        %s274 = sand.u32 %s71, 1
        %s275 = smul.addr %s274, 8
        %s276 = scalar_lea.vmem [#allocation3], %s275
        %p277 = pneg %p84
        %p278 = pneg %p81
        %s279 = sand.u32 %s99, 1
        %s280 = scalar_lea.sflag [#allocation6], %s279
        %s281 = sand.u32 %s99, 1
        %s282 = smul.addr %s281, 8
        %s283 = scalar_lea.vmem [#allocation5], %s282
        %p284 = pneg %p112
        %p285 = pneg %p109
        %p286 = scmp.lt.s32.totalorder %s25, 1
        %s287 = scalar_select %p286, %s25, 1
        %s288 = smul.addr %s287, 8
        %s289 = scalar_lea.vmem %s3, %s288
        %p290 = pneg %p138
        %p291 = pneg %p135
        %p292 = pneg %p164
        %p293 = pneg %p161
        %p294 = scmp.lt.s32.totalorder %s25, 1
        %s295 = scalar_select %p294, %s25, 1
        %s296 = smul.addr %s295, 8
        %s297 = scalar_lea.vmem %s4, %s296
        %p298 = scmp.lt.s32.totalorder %s25, 1
        %s299 = scalar_select %p298, %s25, 1
        %p300 = scmp.lt.s32.totalorder %s26, 0
        %s301 = scalar_select %p300, %s26, 0
        %s302 = sadd.s32 %s301, %s299
        %s303 = smul.addr %s302, 8
        %s304 = scalar_lea.vmem %s0, %s303
        %p305 = scmp.lt.s32.totalorder %s25, 1
        %s306 = scalar_select %p305, %s25, 1
        %s307 = smul.addr %s306, 8
        %s308 = scalar_lea.vmem %s3, %s307
        %p309 = scmp.lt.s32.totalorder %s25, 1
        %s310 = scalar_select %p309, %s25, 1
        %s311 = smul.addr %s310, 8
        %s312 = scalar_lea.vmem %s4, %s311
        %p313 = scmp.eq.s32.totalorder %s26, 0
        // Predicated region
        $region45: #{tpu_custom_call.1} parent=35 // pred_check
          %p314 = pneg %p313
        $region46: #{tpu_custom_call.1} parent=35 // pred_check_branch
          %316 = sbr.rel (%p314) target = $region48
        $region47: #{tpu_custom_call.1} parent=35 // pred_region
          %317 = vst [vmem:[#allocation2] sm:$0xff] 0.0
        $region48: #{tpu_custom_call.1} parent=35 // pred_fallthru
          _
        %v318 = vld [vmem:[#allocation2] sm:$0xff]
        %v319 = vld [vmem:[%s304] sm:$0xff]
        %v320 = vld [vmem:[%s249] sm:$0xff]
        %v321 = vld [vmem:[%s258] sm:$0xff]
        %v322 = vsub.f32 %v319, %v320
        %v323 = vand.u32 2147483647, %v322
        %vm324 = vcmp.lt.f32.partialorder %v323, 1.0
        %v325 = vmul.f32 %v322, %v322
        %v326 = vsub.f32 %v323, 0.5
        %v327 = vsel %vm324, %v325, %v326
        %v328 = vmul.f32 %v327, %v321
        %v329 = vadd.f32 %v318, %v328
        %330 = vst [vmem:[#allocation2] sm:$0xff] %v329
        // Predicated region
        $region49: #{tpu_custom_call.1} parent=35 // pred_check
          %p331 = pneg %p313
        $region50: #{tpu_custom_call.1} parent=35 // pred_check_branch
          %333 = sbr.rel (%p331) target = $region52
        $region51: #{tpu_custom_call.1} parent=35 // pred_region
          %v334 = vld [vmem:[#allocation2] sm:$0xff]
          %335 = vadd.xlane.f32.xlu0 %v334
          %v336 = vpop.xlane.xlu0 %335
          %v337 = vld [vmem:[%s308] sm:$0xff]
          %v338 = vmul.f32 %v336, %v337
          %v339 = vmul.f32 %v338, 0.5
          %vm340 = vcmask 7168
          %341 = vst.msk [vmem:[%s312] sm:$0xff] %vm340, %v339
        $region52: #{tpu_custom_call.1} parent=35 // pred_fallthru
          _
        %p342 = scmp.lt.s32.totalorder %s25, 1
        %s343 = scalar_select %p342, %s25, 1
        %s344 = smul.addr %s343, 8
        %s345 = scalar_lea.vmem %s4, %s344
        // Predicated region
        $region53: #{tpu_custom_call.1} parent=35 // pred_check
          %p346 = pneg %p161
        $region54: #{tpu_custom_call.1} parent=35 // pred_check_branch
          %348 = sbr.rel (%p346) target = $region56
        $region55: #{tpu_custom_call.1} parent=35 // pred_region
          _
        $region56: #{tpu_custom_call.1} parent=35 // pred_fallthru
          _
      $region36: #{tpu_custom_call.1} parent=5 // pred_fallthru
        _
      %p349 = scmp.le.s32.totalorder 2, %s16
      // Predicated region
      $region57: #{tpu_custom_call.1} parent=5 // pred_check
        %p350 = pneg %p349
      $region58: #{tpu_custom_call.1} parent=5 // pred_check_branch
        %352 = sbr.rel (%p350) target = $region60
      $region59: #{tpu_custom_call.1} parent=5 // pred_region
        %s353 = ssub.s32 %s16, 2
        // Predicated region
        $region61: #{tpu_custom_call.1} parent=59 // pred_check
          %p354 = pneg %p167
        $region62: #{tpu_custom_call.1} parent=59 // pred_check_branch
          %356 = sbr.rel (%p354) target = $region64
        $region63: #{tpu_custom_call.1} parent=59 // pred_region
          %p357 = scmp.lt.s32.totalorder %s27, 1
          %s358 = scalar_select %p357, %s27, 1
          %s359 = smul.addr %s358, 8
          %s360 = scalar_lea.vmem %s4, %s359
        $region64: #{tpu_custom_call.1} parent=59 // pred_fallthru
          _
      $region60: #{tpu_custom_call.1} parent=5 // pred_fallthru
        _
    $region6: #{tpu_custom_call.1} parent=1 // loop_footer
      %s20 = sadd.s32 1, %s16
    $region7: #{tpu_custom_call.1} parent=1 // loop_footer_branch
      %15 = sbr.rel target = $region3
    $region8: #{tpu_custom_call.1} parent=1 // loop_exit
      _
    %361 = vsyncpa [#allocation4], 1
    %s362 = scalar_lea.sflag [#allocation4], 1
    %363 = vsyncpa %s362, 1
    %364 = vsyncpa [#allocation6], 1
    %s365 = scalar_lea.sflag [#allocation6], 1
    %366 = vsyncpa %s365, 1

</llo_original>
